<compile_context>
chip_gen: v5e
topology: v5e:2x2
jax: 0.10.0
libtpu: 0.0.40
codegen_flags: <defaults>
</compile_context>

<pallas_src>
import functools
import math

import jax
import jax.numpy as jnp
from jax.experimental import pallas as pl
from jax.experimental.pallas import tpu as pltpu

LOG5 = math.log(5.0)


def _round_up(x: int, m: int) -> int:
    return ((x + m - 1) // m) * m


def _choose_batch_tile(B: int, block_b: int) -> int:
    """Batch tile: multiple of 8, capped by block_b, and (for non-tiny B)
    at least 2 grid steps so both v7x TensorCores get work."""
    B8 = _round_up(B, 8)
    if B8 <= 16:
        return B8
    n_steps = max(2, pl.cdiv(B8, block_b))
    return _round_up(pl.cdiv(B8, n_steps), 8)


# ---------------------------------------------------------------------------
# Kernel
# ---------------------------------------------------------------------------
def encoder_kernel(x_ref, w1_ref, b1_ref, wh_ref, bh_ref, mu_ref, lv_ref, *,
                   latent):
    # Cast x in-kernel (no extra HBM pass in the wrapper).
    x = x_ref[...].astype(w1_ref.dtype)

    # h1 = relu(x @ W1 + b1): matmul on MXU, bias/ReLU in f32 on the VPU.
    h1 = jnp.dot(x, w1_ref[...], preferred_element_type=jnp.float32)
    h1 = jnp.maximum(h1 + b1_ref[...], 0.0)

    # Fused heads: y[:, :L] = mu, y[:, L:2L] = log_var (pre-clamp).
    y = jnp.dot(h1.astype(wh_ref.dtype), wh_ref[...],
                preferred_element_type=jnp.float32)
    y = y + bh_ref[...]

    mu_ref[...] = y[:, :latent].astype(mu_ref.dtype)
    lv_ref[...] = jnp.minimum(y[:, latent:], LOG5).astype(lv_ref.dtype)


# ---------------------------------------------------------------------------
# One-time parameter packing (hoisted out of the per-call path)
# ---------------------------------------------------------------------------
def pack_encoder_params(w1, b1, w21, b21, w22, b22, *, use_bf16=True):
    """Weights are given pre-transposed to [in, out]; biases [1, out].

    Returns padded / fused / dtype-cast parameters.  Padding is exact:
    padded hidden columns are relu(0 + 0) = 0 and hit zero rows of the
    fused head weight."""
    F_in, H = w1.shape
    L = w21.shape[1]
    H_pad = _round_up(H, 128)
    mm_dtype = jnp.bfloat16 if use_bf16 else jnp.float32

    w1_p = jnp.zeros((F_in, H_pad), mm_dtype).at[:, :H].set(w1.astype(mm_dtype))
    b1_p = jnp.zeros((1, H_pad), jnp.float32).at[:, :H].set(b1.astype(jnp.float32))

    wh = jnp.concatenate([w21, w22], axis=1)                     # [H, 2L]
    bh = jnp.concatenate([b21, b22], axis=1)                     # [1, 2L]
    wh_p = jnp.zeros((H_pad, 2 * L), mm_dtype).at[:H, :].set(wh.astype(mm_dtype))
    bh_p = bh.astype(jnp.float32)

    return (w1_p, b1_p, wh_p, bh_p)


# ---------------------------------------------------------------------------
# Forward
# ---------------------------------------------------------------------------
@functools.partial(jax.jit, static_argnames=("block_b", "use_bf16"))
def encoder_forward(x, params, *, block_b=2048, use_bf16=True):
    """x: [B, F_in] float32.  params: output of pack_encoder_params."""
    w1_p, b1_p, wh_p, bh_p = params
    B, F_in = x.shape
    H_pad = w1_p.shape[1]
    OUT = wh_p.shape[1]
    L = OUT // 2

    out_dtype = jnp.bfloat16 if use_bf16 else jnp.float32

    TB = _choose_batch_tile(B, block_b)
    grid = (pl.cdiv(B, TB),)

    mu, log_var = pl.pallas_call(
        functools.partial(encoder_kernel, latent=L),
        out_shape=(jax.ShapeDtypeStruct((B, L), out_dtype),
                   jax.ShapeDtypeStruct((B, L), out_dtype)),
        grid=grid,
        in_specs=[
            # Batch-tiled, UNPADDED activation (double-buffered across steps).
            pl.BlockSpec((TB, F_in), lambda i: (i, 0)),
            # Weights / biases: constant index_map -> resident in VMEM.
            pl.BlockSpec((F_in, H_pad), lambda i: (0, 0)),
            pl.BlockSpec((1, H_pad), lambda i: (0, 0)),
            pl.BlockSpec((H_pad, OUT), lambda i: (0, 0)),
            pl.BlockSpec((1, OUT), lambda i: (0, 0)),
        ],
        out_specs=(
            pl.BlockSpec((TB, L), lambda i: (i, 0)),
            pl.BlockSpec((TB, L), lambda i: (i, 0)),
        ),
        compiler_params=pltpu.CompilerParams(
            dimension_semantics=("parallel",),
            vmem_limit_bytes=32 * 1024 * 1024),
    )(x, w1_p, b1_p, wh_p, bh_p)

    return mu, log_var


# ---------------------------------------------------------------------------
# Helpers for the demo
# ---------------------------------------------------------------------------
def init_linear(key, fan_in, fan_out):
    """Deterministic init mimicking nn.Linear (uniform +-1/sqrt(fan_in)).
    Weight returned already transposed to [in, out]; bias as [1, out]."""
    kw, kb = jax.random.split(key)
    bound = 1.0 / math.sqrt(fan_in)
    w = jax.random.uniform(kw, (fan_in, fan_out), jnp.float32, -bound, bound)
    b = jax.random.uniform(kb, (1, fan_out), jnp.float32, -bound, bound)
    return w, b


if __name__ == "__main__":
    # Small shapes consistent with the module.
    B = 8
    n_input_features = 32
    n_hidden_neurons = 64
    n_latent_features = 16

    key = jax.random.PRNGKey(0)
    kx, k1, k2, k3 = jax.random.split(key, 4)

    x = jax.random.normal(kx, (B, n_input_features), jnp.float32)

    w1, b1 = init_linear(k1, n_input_features, n_hidden_neurons)
    w21, b21 = init_linear(k2, n_hidden_neurons, n_latent_features)
    w22, b22 = init_linear(k3, n_hidden_neurons, n_latent_features)

    # Pure-f32 reference (exact PyTorch encode semantics).
    h1_ref = jnp.maximum(x @ w1 + b1, 0.0)
    mu_ref = h1_ref @ w21 + b21
    lv_ref = jnp.minimum(h1_ref @ w22 + b22, LOG5)

    # 1) f32 path: must match the reference tightly.
    params_f32 = pack_encoder_params(w1, b1, w21, b21, w22, b22, use_bf16=False)
    mu_f32, lv_f32 = encoder_forward(x, params_f32, use_bf16=False)
    jax.block_until_ready((mu_f32, lv_f32))
    assert jnp.allclose(mu_f32, mu_ref, atol=1e-4), "mu mismatch (f32 path)"
    assert jnp.allclose(lv_f32, lv_ref, atol=1e-4), "log_var mismatch (f32 path)"

    # 2) bf16-on-MXU path (v6e/v7x throughput, bf16 writeback): loose check vs
    #    the f32 reference and tighter check vs a matching-precision JAX ref.
    params_bf = pack_encoder_params(w1, b1, w21, b21, w22, b22, use_bf16=True)
    mu_bf, lv_bf = encoder_forward(x, params_bf, use_bf16=True)
    jax.block_until_ready((mu_bf, lv_bf))

    x_m = x.astype(jnp.bfloat16)
    h1_m = jnp.maximum(
        jnp.dot(x_m, w1.astype(jnp.bfloat16),
                preferred_element_type=jnp.float32) + b1, 0.0)
    wh_m = jnp.concatenate([w21, w22], axis=1).astype(jnp.bfloat16)
    bh_m = jnp.concatenate([b21, b22], axis=1)
    y_m = jnp.dot(h1_m.astype(jnp.bfloat16), wh_m,
                  preferred_element_type=jnp.float32) + bh_m
    mu_m = y_m[:, :n_latent_features]
    lv_m = jnp.minimum(y_m[:, n_latent_features:], LOG5)

    mu_bf_f = mu_bf.astype(jnp.float32)
    lv_bf_f = lv_bf.astype(jnp.float32)
    assert jnp.allclose(mu_bf_f, mu_m, atol=3e-2), \
        "mu mismatch (bf16 path vs matching-precision ref)"
    assert jnp.allclose(lv_bf_f, lv_m, atol=3e-2), \
        "log_var mismatch (bf16 path vs matching-precision ref)"
    assert jnp.allclose(mu_bf_f, mu_ref, atol=6e-2), "mu far from f32 reference"
    assert jnp.allclose(lv_bf_f, lv_ref, atol=6e-2), "log_var far from f32 reference"

    print("KERNEL_OK")
</pallas_src>

<mosaic_0001>
module attributes {stable_mosaic.version = 11 : i64} {
  func.func @encoder_kernel(%arg0: i32, %arg1: memref<8x32xf32, #tpu.memory_space<vmem>>, %arg2: memref<32x128xf32, #tpu.memory_space<vmem>>, %arg3: memref<1x128xf32, #tpu.memory_space<vmem>>, %arg4: memref<128x32xf32, #tpu.memory_space<vmem>>, %arg5: memref<1x32xf32, #tpu.memory_space<vmem>>, %arg6: memref<8x16xf32, #tpu.memory_space<vmem>>, %arg7: memref<8x16xf32, #tpu.memory_space<vmem>>) attributes {dimension_semantics = [#tpu.dimension_semantics<parallel>], iteration_bounds = array<i64: 1>, scalar_prefetch = 0 : i64, scratch_operands = 0 : i64, tpu.core_type = #tpu.core_type<tc>, window_params = [{transform_indices = @transform_0, window_bounds = array<i64: 8, 32>}, {pipeline_mode = #tpu.pipeline_mode<synchronous>, transform_indices = @transform_1, window_bounds = array<i64: 32, 128>}, {pipeline_mode = #tpu.pipeline_mode<synchronous>, transform_indices = @transform_2, window_bounds = array<i64: 1, 128>}, {pipeline_mode = #tpu.pipeline_mode<synchronous>, transform_indices = @transform_3, window_bounds = array<i64: 128, 32>}, {pipeline_mode = #tpu.pipeline_mode<synchronous>, transform_indices = @transform_4, window_bounds = array<i64: 1, 32>}, {transform_indices = @transform_5, window_bounds = array<i64: 8, 16>}, {transform_indices = @transform_6, window_bounds = array<i64: 8, 16>}]} {
    %c0 = arith.constant 0 : index
    %c0_0 = arith.constant 0 : index
    %0 = vector.load %arg1[%c0, %c0_0] : memref<8x32xf32, #tpu.memory_space<vmem>>, vector<8x32xf32>
    %c0_1 = arith.constant 0 : index
    %c0_2 = arith.constant 0 : index
    %1 = vector.load %arg2[%c0_1, %c0_2] : memref<32x128xf32, #tpu.memory_space<vmem>>, vector<32x128xf32>
    %cst = arith.constant dense<0.000000e+00> : vector<8x128xf32>
    %2 = tpu.matmul %0, %1, %cst {dimension_numbers = #tpu.dot_dimension_numbers<[1], [0], [0], [1], [0, 0, 1, 1], [], []>} : vector<8x32xf32>, vector<32x128xf32>, vector<8x128xf32> -> vector<8x128xf32>
    %c0_3 = arith.constant 0 : index
    %c0_4 = arith.constant 0 : index
    %3 = vector.load %arg3[%c0_3, %c0_4] : memref<1x128xf32, #tpu.memory_space<vmem>>, vector<1x128xf32>
    %4 = vector.broadcast %3 : vector<1x128xf32> to vector<8x128xf32>
    %5 = arith.addf %2, %4 : vector<8x128xf32>
    %cst_5 = arith.constant 0.000000e+00 : f32
    %6 = vector.broadcast %cst_5 : f32 to vector<8x128xf32>
    %7 = arith.maximumf %5, %6 : vector<8x128xf32>
    %c0_6 = arith.constant 0 : index
    %c0_7 = arith.constant 0 : index
    %8 = vector.load %arg4[%c0_6, %c0_7] : memref<128x32xf32, #tpu.memory_space<vmem>>, vector<128x32xf32>
    %cst_8 = arith.constant dense<0.000000e+00> : vector<8x32xf32>
    %9 = tpu.matmul %7, %8, %cst_8 {dimension_numbers = #tpu.dot_dimension_numbers<[1], [0], [0], [1], [0, 0, 1, 1], [], []>} : vector<8x128xf32>, vector<128x32xf32>, vector<8x32xf32> -> vector<8x32xf32>
    %c0_9 = arith.constant 0 : index
    %c0_10 = arith.constant 0 : index
    %10 = vector.load %arg5[%c0_9, %c0_10] : memref<1x32xf32, #tpu.memory_space<vmem>>, vector<1x32xf32>
    %11 = vector.broadcast %10 : vector<1x32xf32> to vector<8x32xf32>
    %12 = arith.addf %9, %11 : vector<8x32xf32>
    %13 = vector.extract_strided_slice %12 {offsets = [0, 0], sizes = [8, 16], strides = [1, 1]} : vector<8x32xf32> to vector<8x16xf32>
    %c0_11 = arith.constant 0 : index
    %c0_12 = arith.constant 0 : index
    %14 = vector.load %arg6[%c0_11, %c0_12] : memref<8x16xf32, #tpu.memory_space<vmem>>, vector<8x16xf32>
    tpu.vector_store %arg6[%c0_11, %c0_12], %13 {strides = array<i32>} : memref<8x16xf32, #tpu.memory_space<vmem>>, vector<8x16xf32>,
    %15 = vector.extract_strided_slice %12 {offsets = [0, 16], sizes = [8, 16], strides = [1, 1]} : vector<8x32xf32> to vector<8x16xf32>
    %cst_13 = arith.constant 1.60943794 : f32
    %16 = vector.broadcast %cst_13 : f32 to vector<8x16xf32>
    %17 = arith.minimumf %15, %16 : vector<8x16xf32>
    %c0_14 = arith.constant 0 : index
    %c0_15 = arith.constant 0 : index
    %18 = vector.load %arg7[%c0_14, %c0_15] : memref<8x16xf32, #tpu.memory_space<vmem>>, vector<8x16xf32>
    tpu.vector_store %arg7[%c0_14, %c0_15], %17 {strides = array<i32>} : memref<8x16xf32, #tpu.memory_space<vmem>>, vector<8x16xf32>,
    return
  }
  func.func @transform_0(%arg0: i32) -> (i32, i32) {
    %c0_i32 = arith.constant 0 : i32
    %c0_i32_0 = arith.constant 0 : i32
    return %arg0, %c0_i32 : i32, i32
  }
  func.func @transform_1(%arg0: i32) -> (i32, i32) {
    %c0_i32 = arith.constant 0 : i32
    %c0_i32_0 = arith.constant 0 : i32
    %c0_i32_1 = arith.constant 0 : i32
    return %c0_i32, %c0_i32_0 : i32, i32
  }
  func.func @transform_2(%arg0: i32) -> (i32, i32) {
    %c0_i32 = arith.constant 0 : i32
    %c0_i32_0 = arith.constant 0 : i32
    %c0_i32_1 = arith.constant 0 : i32
    return %c0_i32, %c0_i32_0 : i32, i32
  }
  func.func @transform_3(%arg0: i32) -> (i32, i32) {
    %c0_i32 = arith.constant 0 : i32
    %c0_i32_0 = arith.constant 0 : i32
    %c0_i32_1 = arith.constant 0 : i32
    return %c0_i32, %c0_i32_0 : i32, i32
  }
  func.func @transform_4(%arg0: i32) -> (i32, i32) {
    %c0_i32 = arith.constant 0 : i32
    %c0_i32_0 = arith.constant 0 : i32
    %c0_i32_1 = arith.constant 0 : i32
    return %c0_i32, %c0_i32_0 : i32, i32
  }
  func.func @transform_5(%arg0: i32) -> (i32, i32) {
    %c0_i32 = arith.constant 0 : i32
    %c0_i32_0 = arith.constant 0 : i32
    return %arg0, %c0_i32 : i32, i32
  }
  func.func @transform_6(%arg0: i32) -> (i32, i32) {
    %c0_i32 = arith.constant 0 : i32
    %c0_i32_0 = arith.constant 0 : i32
    return %arg0, %c0_i32 : i32, i32
  }
}

</mosaic_0001>

<llo_original>
// kernel: encoder_forward.1
$region0: #{encoder_forward.1}
  #allocation0 [shape = 'u32[]', space=smem, size = 0x4, offset = 0x4, fixed_abs, tag = 'smem constant byte address 0x4 - core index']
  #allocation1 [shape = 'u32[72,128]{1,0:T(1,128)}', space=vmem, size = 0x9000, scoped, tag = 'internal scratch']
  %s0 = inlined_call_operand.vmem [shape: f32[8,32], index: 0, kind: input, shape index: {}]
  %s1 = inlined_call_operand.vmem [shape: f32[32,128], index: 1, kind: input, shape index: {}]
  %s2 = inlined_call_operand.vmem [shape: f32[1,128], index: 2, kind: input, shape index: {}]
  %s3 = inlined_call_operand.vmem [shape: f32[128,32], index: 3, kind: input, shape index: {}]
  %s4 = inlined_call_operand.vmem [shape: f32[1,32], index: 4, kind: input, shape index: {}]
  %s5 = inlined_call_operand.hbm [shape: f32[8,16], index: 5, kind: output, shape index: {0}]
  %s6 = inlined_call_operand.hbm [shape: f32[8,16], index: 6, kind: output, shape index: {1}]
  %7 = xla_tuple %s5, %s6
  %s8 = sld [smem:[#allocation0]]
  $region38: #{encoder_forward.1} parent=0
    _
  %s10 = ssub.s32 1, %s8
  %s11 = scalar_select 0, %s10, %s8
  $region1: #{encoder_forward.1} parent=0
    #allocation2 [shape = 'u8[4096]{0}', space=vmem, size = 0x1000, scoped, tag = 'output window, operand 0, single buffered']
    #allocation3 [shape = 's32[1]{0}', space=sflag, size = 0x4, scoped, tag = 'scoped memory for encoder_forward.1']
    #allocation4 [shape = 'u8[4096]{0}', space=vmem, size = 0x1000, scoped, tag = 'output window, operand 1, single buffered']
    #allocation5 [shape = 's32[1]{0}', space=sflag, size = 0x4, scoped, tag = 'scoped memory for encoder_forward.1']
    %12 = vsyncpa [#allocation3], 0
    %13 = vsyncpa [#allocation5], 0
    // Predicated region
    $region2: #{encoder_forward.1} parent=1 // pred_check
      _
    $region3: #{encoder_forward.1} parent=1 // pred_check_branch
      %15 = sbr.rel (0) target = $region5
    $region4: #{encoder_forward.1} parent=1 // pred_region
      _
    $region5: #{encoder_forward.1} parent=1 // pred_fallthru
      _
    // Predicated region
    $region6: #{encoder_forward.1} parent=1 // pred_check
      _
    $region7: #{encoder_forward.1} parent=1 // pred_check_branch
      %17 = sbr.rel (0) target = $region9
    $region8: #{encoder_forward.1} parent=1 // pred_region
      _
    $region9: #{encoder_forward.1} parent=1 // pred_fallthru
      _
    // Predicated region
    $region10: #{encoder_forward.1} parent=1 // pred_check
      _
    $region11: #{encoder_forward.1} parent=1 // pred_check_branch
      %19 = sbr.rel (0) target = $region13
    $region12: #{encoder_forward.1} parent=1 // pred_region
      _
    $region13: #{encoder_forward.1} parent=1 // pred_fallthru
      _
    // Predicated region
    $region14: #{encoder_forward.1} parent=1 // pred_check
      _
    $region15: #{encoder_forward.1} parent=1 // pred_check_branch
      %21 = sbr.rel (0) target = $region17
    $region16: #{encoder_forward.1} parent=1 // pred_region
      _
    $region17: #{encoder_forward.1} parent=1 // pred_fallthru
      _
    // Predicated region
    $region18: #{encoder_forward.1} parent=1 // pred_check
      _
    $region19: #{encoder_forward.1} parent=1 // pred_check_branch
      %23 = sbr.rel (0) target = $region21
    $region20: #{encoder_forward.1} parent=1 // pred_region
      _
    $region21: #{encoder_forward.1} parent=1 // pred_fallthru
      _
    %v24 = vld [vmem:[%s0] sm:$0xff]
    %v25 = vld [vmem:[%s1] sm:$0xff]
    %v26 = vld [vmem:[%s1 + $0x8] sm:$0xff]
    %v27 = vld [vmem:[%s1 + $0x10] sm:$0xff]
    %v28 = vld [vmem:[%s1 + $0x18] sm:$0xff]
    %v29 = vld [vmem:[%s2] sm:$0x1]
    %v31 = vperm.slane %v29, 0
    %vm33 = vcmask 261120
    %v35 = vsel %vm33, %v24, 0
    %37 = vmatpush.msra.mxu0 0.0
    %38 = vmatpush.msra.mxu0 0.0
    %39 = vmatpush.msra.mxu0 0.0
    %40 = vmatpush.msra.mxu0 0.0
    %41 = vmatpush.msra.mxu0 0.0
    %42 = vmatpush.msra.mxu0 0.0
    %43 = vmatpush.msra.mxu0 0.0
    %44 = vmatpush.msra.mxu0 0.0
    %45 = vmatpush.msra.mxu0 0.0
    %46 = vmatpush.msra.mxu0 0.0
    %47 = vmatpush.msra.mxu0 0.0
    %48 = vmatpush.msra.mxu0 0.0
    %49 = vmatpush.msra.mxu0 %v28
    %50 = vmatpush.msra.mxu0 %v27
    %51 = vmatpush.msra.mxu0 %v26
    %52 = vmatpush.msra.mxu0 %v25
    %53 = vmatmul.f32.gmra.mxu0 %v35
    %v54 = vpop.f32.mrf.mxu0
    %v55 = vadd.f32 %v31, %v54
    %56 = vdwg.mxu0
    %v57 = vmax.f32 %v55, 0.0
    %v58 = vld [vmem:[%s3] sm:$0xff]
    %v59 = vld [vmem:[%s3 + $0x8] sm:$0xff]
    %v60 = vld [vmem:[%s3 + $0x10] sm:$0xff]
    %v61 = vld [vmem:[%s3 + $0x18] sm:$0xff]
    %v62 = vld [vmem:[%s3 + $0x20] sm:$0xff]
    %v63 = vld [vmem:[%s3 + $0x28] sm:$0xff]
    %v64 = vld [vmem:[%s3 + $0x30] sm:$0xff]
    %v65 = vld [vmem:[%s3 + $0x38] sm:$0xff]
    %v66 = vld [vmem:[%s3 + $0x40] sm:$0xff]
    %v67 = vld [vmem:[%s3 + $0x48] sm:$0xff]
    %v68 = vld [vmem:[%s3 + $0x50] sm:$0xff]
    %v69 = vld [vmem:[%s3 + $0x58] sm:$0xff]
    %v70 = vld [vmem:[%s3 + $0x60] sm:$0xff]
    %v71 = vld [vmem:[%s3 + $0x68] sm:$0xff]
    %v72 = vld [vmem:[%s3 + $0x70] sm:$0xff]
    %v73 = vld [vmem:[%s3 + $0x78] sm:$0xff]
    %v74 = vld [vmem:[%s4] sm:$0x1]
    %v76 = vperm.slane %v74, 0
    %78 = vmatpush.msra.mxu0 %v73
    %79 = vmatpush.msra.mxu0 %v72
    %80 = vmatpush.msra.mxu0 %v71
    %81 = vmatpush.msra.mxu0 %v70
    %82 = vmatpush.msra.mxu0 %v69
    %83 = vmatpush.msra.mxu0 %v68
    %84 = vmatpush.msra.mxu0 %v67
    %85 = vmatpush.msra.mxu0 %v66
    %86 = vmatpush.msra.mxu0 %v65
    %87 = vmatpush.msra.mxu0 %v64
    %88 = vmatpush.msra.mxu0 %v63
    %89 = vmatpush.msra.mxu0 %v62
    %90 = vmatpush.msra.mxu0 %v61
    %91 = vmatpush.msra.mxu0 %v60
    %92 = vmatpush.msra.mxu0 %v59
    %93 = vmatpush.msra.mxu0 %v58
    %94 = vmatmul.f32.gmra.mxu0 %v57
    %v95 = vpop.f32.mrf.mxu0
    %v96 = vadd.f32 %v76, %v95
    %97 = vdwg.mxu0
    %vm98 = vcmask 130048
    %99 = vst.msk [vmem:[#allocation2] sm:$0xff] %vm98, %v96
    %v100 = vmin.f32 %v96, 1.609438
    %102 = vrot.lane.b32.xlu0 %v100, 112
    %v103 = vpop.permute.xlu0 %102
    %105 = vst.msk [vmem:[#allocation4] sm:$0xff] %vm98, %v103
    // Predicated region
    $region22: #{encoder_forward.1} parent=1 // pred_check
      _
    $region23: #{encoder_forward.1} parent=1 // pred_check_branch
      %107 = sbr.rel (0) target = $region25
    $region24: #{encoder_forward.1} parent=1 // pred_region
      %109 = vsyncadd [#allocation3], 0
      %s111 = sshll.u32 [#allocation2], 4
      %s112 = int_to_ptr.vmem [resolvable:$true] %s111
      %s113 = sshll.u32 %s5, 4
      %s114 = int_to_ptr.hbm [resolvable:$true] %s113
      %116 = dma.vmem_to_hbm [thread:$0]  %s112, 128, %s114, [#allocation3]
    $region25: #{encoder_forward.1} parent=1 // pred_fallthru
      _
    // Predicated region
    $region26: #{encoder_forward.1} parent=1 // pred_check
      _
    $region27: #{encoder_forward.1} parent=1 // pred_check_branch
      %118 = sbr.rel (0) target = $region29
    $region28: #{encoder_forward.1} parent=1 // pred_region
      %120 = vsyncadd [#allocation5], 0
      %s122 = sshll.u32 [#allocation4], 4
      %s123 = int_to_ptr.vmem [resolvable:$true] %s122
      %s124 = sshll.u32 %s6, 4
      %s125 = int_to_ptr.hbm [resolvable:$true] %s124
      %127 = dma.vmem_to_hbm [thread:$0]  %s123, 128, %s125, [#allocation5]
    $region29: #{encoder_forward.1} parent=1 // pred_fallthru
      _
    // Predicated region
    $region30: #{encoder_forward.1} parent=1 // pred_check
      _
    $region31: #{encoder_forward.1} parent=1 // pred_check_branch
      %129 = sbr.rel (0) target = $region33
    $region32: #{encoder_forward.1} parent=1 // pred_region
      %131 = dma.done [#allocation3], 128
    $region33: #{encoder_forward.1} parent=1 // pred_fallthru
      _
    // Predicated region
    $region34: #{encoder_forward.1} parent=1 // pred_check
      _
    $region35: #{encoder_forward.1} parent=1 // pred_check_branch
      %133 = sbr.rel (0) target = $region37
    $region36: #{encoder_forward.1} parent=1 // pred_region
      %135 = dma.done [#allocation5], 128
    $region37: #{encoder_forward.1} parent=1 // pred_fallthru
      _
    %136 = vsyncpa [#allocation3], 1
    %137 = vsyncpa [#allocation5], 1

</llo_original>
